<compile_context>
chip_gen: v5e
topology: v5e:2x2
jax: 0.10.0
libtpu: 0.0.40
codegen_flags: <defaults>
</compile_context>

<pallas_src>
import jax
import jax.numpy as jnp
from jax.experimental import pallas as pl
from jax.experimental.pallas import tpu as pltpu


# Sublane packing per itemsize: f32 -> 8 rows/vreg, bf16 -> 16, int8/fp8 -> 32.
_SUBLANE = {4: 8, 2: 16, 1: 32}


def _vmem_budgets():
    """(pipeline working-set budget, vmem_limit_bytes), generation-aware.

    v7x has only 64 MiB VMEM per TensorCore -> target ~22 MiB of pipeline
    working set and cap the scoped limit at 40 MiB (leaves room for Mosaic
    internal scratch).  128 MiB parts (v5e / v6e) get a 64 MiB working set and
    a 96 MiB limit so the tile picker can take larger row tiles (fewer
    ~0.35 us grid steps).
    """
    cap = None
    try:
        cap = getattr(pltpu.get_tpu_info(), "vmem_capacity_bytes", None)
    except Exception:
        cap = None
    if cap is None:
        cap = 128 << 20
    if cap <= (64 << 20):
        return 22 << 20, 40 << 20
    return 64 << 20, 96 << 20


def _pick_row_tile(R, H, dtype, budget):
    """Largest row tile whose double-buffered in/out blocks PLUS the in-kernel
    f32 temporaries fit the VMEM budget, with an even-ish grid step count so a
    `parallel` axis shards cleanly across v7x's two TensorCores."""
    itemsize = jnp.dtype(dtype).itemsize
    sub = _SUBLANE.get(itemsize, 8)
    # Per-row bytes:  (1 in + 1 out) * 2 buffers * itemsize  +  ~2 f32 temps
    # (x.astype(f32) and the x*inv product materialize (tile, H) f32 scratch,
    # which the previous version did not budget).
    bytes_per_row = (4 * itemsize + 8) * H
    max_rows = max(budget // bytes_per_row, sub)
    tile = min(max_rows, 1024)
    # Keep >= ~8 grid steps when R allows (pipeline depth + 2-TC split).
    tile = min(tile, max(pl.cdiv(R, 8), sub))
    # Round down to the sublane-packing multiple so stores stay unmasked.
    tile = max((tile // sub) * sub, sub)
    # Prefer an even step count so v7x's two TensorCores get equal work.
    steps = pl.cdiv(R, tile)
    if steps > 1 and steps % 2 == 1:
        alt = max(pl.cdiv(pl.cdiv(R, steps + 1), sub) * sub, sub)
        if pl.cdiv(R, alt) % 2 == 0:
            tile = alt
    return tile


def _make_kernel(eps, inv_h, has_w, has_b):
    def kernel(*refs):
        x_ref, o_ref = refs[0], refs[-1]
        x = x_ref[...].astype(jnp.float32)                    # x.float()
        # sum * (1/H) instead of mean -> XLU reduce + compile-time-constant mul.
        ms = jnp.sum(x * x, axis=-1, keepdims=True) * inv_h
        inv = jax.lax.rsqrt(ms + eps)                         # EUP rsqrt (free slot)
        y = (x * inv).astype(o_ref.dtype)                     # .type_as(x)
        i = 1
        if has_w:                                             # affine only when present
            y = y * refs[i][...]
            i += 1
            if has_b:
                y = y + refs[i][...]
        o_ref[...] = y
    return kernel


def rms_norm(x, weight=None, bias=None, *, eps=1e-5, row_tile=None):
    """RMSNorm over the trailing `weight.ndim` dims (or the last dim if no
    weight), with optional elementwise affine (+ bias, only when weight given)."""
    orig_shape = x.shape
    norm_ndim = weight.ndim if weight is not None else 1
    H = 1
    for d in orig_shape[len(orig_shape) - norm_ndim:]:
        H *= int(d)
    x2d = x.reshape(-1, H)
    R = x2d.shape[0]

    has_w = weight is not None
    has_b = has_w and bias is not None   # PyTorch applies bias only under the weight branch

    budget, vmem_limit = _vmem_budgets()
    itemsize = jnp.dtype(x.dtype).itemsize
    sub = _SUBLANE.get(itemsize, 8)

    if (4 * itemsize + 8) * H * sub > budget:
        # Even a minimal sublane-height block (+ its f32 temporaries) does not
        # fit VMEM for this H.
        # TODO(synk): H-chunked two-pass Pallas path for extremely wide
        # normalized_shape; fall back to plain JAX (XLA) for now.
        xf = x2d.astype(jnp.float32)
        y = (xf * jax.lax.rsqrt(jnp.mean(xf * xf, -1, keepdims=True) + eps)).astype(x.dtype)
        if has_w:
            y = y * weight.reshape(1, H).astype(x.dtype)
            if has_b:
                y = y + bias.reshape(1, H).astype(x.dtype)
        return y.reshape(orig_shape)

    if row_tile is None:
        row_tile = _pick_row_tile(R, H, x.dtype, budget)
    grid = pl.cdiv(R, row_tile)          # non-divisible R -> masked tail tile

    kernel = _make_kernel(float(eps), 1.0 / H, has_w, has_b)

    operands = [x2d]
    in_specs = [pl.BlockSpec((row_tile, H), lambda i: (i, 0))]
    if has_w:
        operands.append(weight.reshape(1, H).astype(x.dtype))
        in_specs.append(pl.BlockSpec((1, H), lambda i: (0, 0)))
        if has_b:
            operands.append(bias.reshape(1, H).astype(x.dtype))
            in_specs.append(pl.BlockSpec((1, H), lambda i: (0, 0)))

    out2d = pl.pallas_call(
        kernel,
        out_shape=jax.ShapeDtypeStruct((R, H), x.dtype),
        grid_spec=pltpu.PrefetchScalarGridSpec(
            num_scalar_prefetch=0,
            grid=(grid,),
            in_specs=in_specs,
            out_specs=pl.BlockSpec((row_tile, H), lambda i: (i, 0)),
        ),
        compiler_params=pltpu.CompilerParams(
            dimension_semantics=("parallel",),
            vmem_limit_bytes=vmem_limit,
        ),
    )(*operands)

    return out2d.reshape(orig_shape)


if __name__ == "__main__":
    key = jax.random.PRNGKey(0)
    kx, kw, kb, kx2, kw2, kx3 = jax.random.split(key, 6)
    eps = 1e-5

    def ref_rms(x, w=None, b=None):
        xf = x.astype(jnp.float32)
        y = (xf * jax.lax.rsqrt(jnp.mean(xf * xf, -1, keepdims=True) + eps)).astype(x.dtype)
        if w is not None:
            y = y * w
            if b is not None:
                y = y + b
        return y

    # 1) f32, weight + bias (normalized_shape = (128,)), batch=2, seq=8
    B, S, H = 2, 8, 128
    x = jax.random.normal(kx, (B, S, H), dtype=jnp.float32)
    w = 1.0 + 0.1 * jax.random.normal(kw, (H,), dtype=jnp.float32)
    b = 0.1 * jax.random.normal(kb, (H,), dtype=jnp.float32)
    out = jax.block_until_ready(rms_norm(x, w, b, eps=eps))
    assert out.shape == x.shape and out.dtype == x.dtype
    assert jnp.allclose(out, ref_rms(x, w, b), atol=1e-5, rtol=1e-5)

    # 2) bf16, weight only (bias=None -> no bias operand in the kernel)
    H2 = 256
    x2 = jax.random.normal(kx2, (2, 8, H2), dtype=jnp.bfloat16)
    w2 = (1.0 + 0.1 * jax.random.normal(kw2, (H2,), dtype=jnp.float32)).astype(jnp.bfloat16)
    out2 = jax.block_until_ready(rms_norm(x2, w2, eps=eps))
    assert out2.shape == x2.shape and out2.dtype == jnp.bfloat16
    assert jnp.allclose(out2.astype(jnp.float32), ref_rms(x2, w2).astype(jnp.float32),
                        atol=2e-2, rtol=2e-2)

    # 3) f32, elementwise_affine=False (no dummy ones/zeros operands)
    x3 = jax.random.normal(kx3, (2, 8, 128), dtype=jnp.float32)
    out3 = jax.block_until_ready(rms_norm(x3, eps=eps))
    assert jnp.allclose(out3, ref_rms(x3), atol=1e-5, rtol=1e-5)

    print("KERNEL_OK")
</pallas_src>

<mosaic_0001>
module attributes {stable_mosaic.version = 11 : i64} {
  func.func @kernel(%arg0: i32, %arg1: memref<8x128xf32, #tpu.memory_space<vmem>>, %arg2: memref<1x128xf32, #tpu.memory_space<vmem>>, %arg3: memref<1x128xf32, #tpu.memory_space<vmem>>, %arg4: memref<8x128xf32, #tpu.memory_space<vmem>>) attributes {dimension_semantics = [#tpu.dimension_semantics<parallel>], iteration_bounds = array<i64: 2>, scalar_prefetch = 0 : i64, scratch_operands = 0 : i64, tpu.core_type = #tpu.core_type<tc>, window_params = [{transform_indices = @transform_0, window_bounds = array<i64: 8, 128>}, {pipeline_mode = #tpu.pipeline_mode<synchronous>, transform_indices = @transform_1, window_bounds = array<i64: 1, 128>}, {pipeline_mode = #tpu.pipeline_mode<synchronous>, transform_indices = @transform_2, window_bounds = array<i64: 1, 128>}, {transform_indices = @transform_3, window_bounds = array<i64: 8, 128>}]} {
    %c0 = arith.constant 0 : index
    %c0_0 = arith.constant 0 : index
    %0 = vector.load %arg1[%c0, %c0_0] : memref<8x128xf32, #tpu.memory_space<vmem>>, vector<8x128xf32>
    %1 = arith.mulf %0, %0 : vector<8x128xf32>
    %cst = arith.constant dense<0.000000e+00> : vector<8xf32>
    %2 = vector.multi_reduction <add>, %1, %cst [1] : vector<8x128xf32> to vector<8xf32>
    %3 = vector.shape_cast %2 : vector<8xf32> to vector<8x1xf32>
    %cst_1 = arith.constant 7.812500e-03 : f32
    %4 = vector.broadcast %cst_1 : f32 to vector<8x1xf32>
    %5 = arith.mulf %3, %4 : vector<8x1xf32>
    %cst_2 = arith.constant 9.99999974E-6 : f32
    %6 = vector.broadcast %cst_2 : f32 to vector<8x1xf32>
    %7 = arith.addf %5, %6 : vector<8x1xf32>
    %8 = math.rsqrt %7 : vector<8x1xf32>
    %9 = vector.broadcast %8 : vector<8x1xf32> to vector<8x128xf32>
    %10 = arith.mulf %0, %9 : vector<8x128xf32>
    %c0_3 = arith.constant 0 : index
    %c0_4 = arith.constant 0 : index
    %11 = vector.load %arg2[%c0_3, %c0_4] : memref<1x128xf32, #tpu.memory_space<vmem>>, vector<1x128xf32>
    %12 = vector.broadcast %11 : vector<1x128xf32> to vector<8x128xf32>
    %13 = arith.mulf %10, %12 : vector<8x128xf32>
    %c0_5 = arith.constant 0 : index
    %c0_6 = arith.constant 0 : index
    %14 = vector.load %arg3[%c0_5, %c0_6] : memref<1x128xf32, #tpu.memory_space<vmem>>, vector<1x128xf32>
    %15 = vector.broadcast %14 : vector<1x128xf32> to vector<8x128xf32>
    %16 = arith.addf %13, %15 : vector<8x128xf32>
    %c0_7 = arith.constant 0 : index
    %c0_8 = arith.constant 0 : index
    %17 = vector.load %arg4[%c0_7, %c0_8] : memref<8x128xf32, #tpu.memory_space<vmem>>, vector<8x128xf32>
    tpu.vector_store %arg4[%c0_7, %c0_8], %16 {strides = array<i32>} : memref<8x128xf32, #tpu.memory_space<vmem>>, vector<8x128xf32>,
    return
  }
  func.func @transform_0(%arg0: i32) -> (i32, i32) {
    %c0_i32 = arith.constant 0 : i32
    %c0_i32_0 = arith.constant 0 : i32
    return %arg0, %c0_i32 : i32, i32
  }
  func.func @transform_1(%arg0: i32) -> (i32, i32) {
    %c0_i32 = arith.constant 0 : i32
    %c0_i32_0 = arith.constant 0 : i32
    %c0_i32_1 = arith.constant 0 : i32
    return %c0_i32, %c0_i32_0 : i32, i32
  }
  func.func @transform_2(%arg0: i32) -> (i32, i32) {
    %c0_i32 = arith.constant 0 : i32
    %c0_i32_0 = arith.constant 0 : i32
    %c0_i32_1 = arith.constant 0 : i32
    return %c0_i32, %c0_i32_0 : i32, i32
  }
  func.func @transform_3(%arg0: i32) -> (i32, i32) {
    %c0_i32 = arith.constant 0 : i32
    %c0_i32_0 = arith.constant 0 : i32
    return %arg0, %c0_i32 : i32, i32
  }
}

</mosaic_0001>

<llo_original>
// kernel: tpu_custom_call.1
$region0: #{tpu_custom_call.1}
  #allocation0 [shape = 'u32[]', space=smem, size = 0x4, offset = 0x4, fixed_abs, tag = 'smem constant byte address 0x4 - core index']
  #allocation1 [shape = 'u32[72,128]{1,0:T(1,128)}', space=vmem, size = 0x9000, scoped, tag = 'internal scratch']
  %s0 = inlined_call_operand.hbm [shape: f32[16,128], index: 0, kind: input, shape index: {}]
  %s1 = inlined_call_operand.hbm [shape: f32[1,128], index: 1, kind: input, shape index: {}]
  %s2 = inlined_call_operand.vmem [shape: f32[1,128], index: 2, kind: input, shape index: {}]
  %s3 = inlined_call_operand.hbm [shape: f32[16,128], index: 3, kind: output, shape index: {}]
  %s4 = sld [smem:[#allocation0]]
  $region53: #{tpu_custom_call.1} parent=0
    _
  %s6 = ssub.s32 1, %s4
  %s7 = scalar_select 0, %s6, %s4
  $region1: #{tpu_custom_call.1} parent=0
    #allocation2 [shape = 'u8[8192]{0}', space=vmem, size = 0x2000, scoped, tag = 'input window, operand 0']
    #allocation3 [shape = 's32[2]{0}', space=sflag, size = 0x8, scoped, tag = 'scoped memory for tpu_custom_call.1']
    #allocation4 [shape = 's32[2]{0}', space=sflag, size = 0x8, scoped, tag = 'scoped memory for tpu_custom_call.1']
    #allocation5 [shape = 'u8[512]{0}', space=vmem, size = 0x400, scoped, tag = 'input window, operand 1, single buffered']
    #allocation6 [shape = 's32[1]{0}', space=sflag, size = 0x4, scoped, tag = 'scoped memory for tpu_custom_call.1']
    #allocation7 [shape = 'u8[8192]{0}', space=vmem, size = 0x2000, scoped, tag = 'output window, operand 0']
    %8 = vsyncpa [#allocation3], 0
    %s9 = scalar_lea.sflag [#allocation3], 1
    %10 = vsyncpa %s9, 0
    %11 = vsyncpa [#allocation6], 0
    %12 = vsyncpa [#allocation4], 0
    %s13 = scalar_lea.sflag [#allocation4], 1
    %14 = vsyncpa %s13, 0
    loop: start=0, step=1, limit=4
    $region2: #{tpu_custom_call.1} parent=1 // loop_pre_header
      _
    $region3: #{tpu_custom_call.1} parent=1 // loop_header
      %s16 = sphi 0, %s20
      %p17 = scmp.ge.s32.totalorder %s16, 4
      %s26 = sphi 0, %s28
      %s29 = sphi 0, %s26
      %s30 = sphi 0, %s29
      %s46 = sphi 0, %s30
      %s50 = sphi 0, %s50
      %s52 = sphi 0, %s50
      %s53 = sphi 0, %s52
      %s67 = sphi 0, %s53
      %s71 = sphi 0, %s71
      %s73 = sphi 0, %s71
      %s74 = sphi 0, %s73
      %s88 = sphi 0, %s74
      %s94 = sphi 0, %s96
      %s97 = sphi 0, %s94
      %s98 = sphi 0, %s97
      %s114 = sphi 0, %s98
    $region4: #{tpu_custom_call.1} parent=1 // loop_header_branch
      %19 = sbr.rel (%p17) target = $region8
    $region5: #{tpu_custom_call.1} parent=1 // loop_body
      %s21 = ssub.s32 %s16, 1
      %s22 = ssub.s32 %s16, 2
      %s23 = sadd.s32 %s16, 1
      %s24 = ssub.s32 %s16, %s23
      %p25 = scmp.eq.s32.totalorder %s24, 0
      %s27 = sadd.s32 %s26, 1
      %s28 = scalar_select %p25, %s26, %s27
      %p31 = pneg %p25
      %p32 = scmp.eq.s32.totalorder %s16, 1
      %p33 = por %p31, %p32
      %p34 = scmp.ne.s32.totalorder %s26, %s29
      %p35 = scmp.eq.s32.totalorder %s16, 0
      %p36 = por %p34, %p35
      %p37 = scmp.ne.s32.totalorder %s26, %s29
      %p38 = scmp.eq.s32.totalorder %s21, 1
      %p39 = por %p37, %p38
      %p40 = scmp.ne.s32.totalorder %s29, %s30
      %p41 = scmp.eq.s32.totalorder %s21, 0
      %p42 = por %p40, %p41
      %p43 = scmp.ne.s32.totalorder %s29, %s30
      %p44 = scmp.eq.s32.totalorder %s22, 1
      %p45 = por %p43, %p44
      %p47 = scmp.ne.s32.totalorder %s30, %s46
      %p48 = scmp.eq.s32.totalorder %s22, 0
      %p49 = por %p47, %p48
      %s51 = sadd.s32 %s50, 1
      %p54 = scmp.eq.s32.totalorder %s16, 1
      %p55 = scmp.ne.s32.totalorder %s50, %s52
      %p56 = scmp.eq.s32.totalorder %s16, 0
      %p57 = por %p55, %p56
      %p58 = scmp.ne.s32.totalorder %s50, %s52
      %p59 = scmp.eq.s32.totalorder %s21, 1
      %p60 = por %p58, %p59
      %p61 = scmp.ne.s32.totalorder %s52, %s53
      %p62 = scmp.eq.s32.totalorder %s21, 0
      %p63 = por %p61, %p62
      %p64 = scmp.ne.s32.totalorder %s52, %s53
      %p65 = scmp.eq.s32.totalorder %s22, 1
      %p66 = por %p64, %p65
      %p68 = scmp.ne.s32.totalorder %s53, %s67
      %p69 = scmp.eq.s32.totalorder %s22, 0
      %p70 = por %p68, %p69
      %s72 = sadd.s32 %s71, 1
      %p75 = scmp.eq.s32.totalorder %s16, 1
      %p76 = scmp.ne.s32.totalorder %s71, %s73
      %p77 = scmp.eq.s32.totalorder %s16, 0
      %p78 = por %p76, %p77
      %p79 = scmp.ne.s32.totalorder %s71, %s73
      %p80 = scmp.eq.s32.totalorder %s21, 1
      %p81 = por %p79, %p80
      %p82 = scmp.ne.s32.totalorder %s73, %s74
      %p83 = scmp.eq.s32.totalorder %s21, 0
      %p84 = por %p82, %p83
      %p85 = scmp.ne.s32.totalorder %s73, %s74
      %p86 = scmp.eq.s32.totalorder %s22, 1
      %p87 = por %p85, %p86
      %p89 = scmp.ne.s32.totalorder %s74, %s88
      %p90 = scmp.eq.s32.totalorder %s22, 0
      %p91 = por %p89, %p90
      %s92 = ssub.s32 %s16, %s23
      %p93 = scmp.eq.s32.totalorder %s92, 0
      %s95 = sadd.s32 %s94, 1
      %s96 = scalar_select %p93, %s94, %s95
      %p99 = pneg %p93
      %p100 = scmp.eq.s32.totalorder %s16, 1
      %p101 = por %p99, %p100
      %p102 = scmp.ne.s32.totalorder %s94, %s97
      %p103 = scmp.eq.s32.totalorder %s16, 0
      %p104 = por %p102, %p103
      %p105 = scmp.ne.s32.totalorder %s94, %s97
      %p106 = scmp.eq.s32.totalorder %s21, 1
      %p107 = por %p105, %p106
      %p108 = scmp.ne.s32.totalorder %s97, %s98
      %p109 = scmp.eq.s32.totalorder %s21, 0
      %p110 = por %p108, %p109
      %p111 = scmp.ne.s32.totalorder %s97, %s98
      %p112 = scmp.eq.s32.totalorder %s22, 1
      %p113 = por %p111, %p112
      %p115 = scmp.ne.s32.totalorder %s98, %s114
      %p116 = scmp.eq.s32.totalorder %s22, 0
      %p117 = por %p115, %p116
      %p118 = scmp.le.s32.totalorder 1, %s16
      %p119 = scmp.lt.s32.totalorder %s16, 3
      %p120 = pnand %p118, %p119
      %p121 = pneg %p120
      // Predicated region
      $region9: #{tpu_custom_call.1} parent=5 // pred_check
        _
      $region10: #{tpu_custom_call.1} parent=5 // pred_check_branch
        %123 = sbr.rel (%p120) target = $region12
      $region11: #{tpu_custom_call.1} parent=5 // pred_region
        %s124 = ssub.s32 %s16, 1
        // Predicated region
        $region13: #{tpu_custom_call.1} parent=11 // pred_check
          %p125 = pneg %p63
        $region14: #{tpu_custom_call.1} parent=11 // pred_check_branch
          %127 = sbr.rel (%p125) target = $region16
        $region15: #{tpu_custom_call.1} parent=11 // pred_region
          %129 = vsyncadd [#allocation6], 0
          %s131 = sshll.u32 %s1, 4
          %s132 = int_to_ptr.hbm [resolvable:$true] %s131
          %s133 = sshll.u32 [#allocation5], 4
          %s134 = int_to_ptr.vmem [resolvable:$true] %s133
          %136 = dma.hbm_to_vmem [thread:$0]  %s132, 16, %s134, [#allocation6]
        $region16: #{tpu_custom_call.1} parent=11 // pred_fallthru
          _
        // Predicated region
        $region17: #{tpu_custom_call.1} parent=11 // pred_check
          %p137 = pneg %p84
        $region18: #{tpu_custom_call.1} parent=11 // pred_check_branch
          %139 = sbr.rel (%p137) target = $region20
        $region19: #{tpu_custom_call.1} parent=11 // pred_region
          _
        $region20: #{tpu_custom_call.1} parent=11 // pred_fallthru
          _
      $region12: #{tpu_custom_call.1} parent=5 // pred_fallthru
        _
      %p140 = scmp.lt.s32.totalorder %s16, 2
      // Predicated region
      $region21: #{tpu_custom_call.1} parent=5 // pred_check
        %p141 = pneg %p140
      $region22: #{tpu_custom_call.1} parent=5 // pred_check_branch
        %143 = sbr.rel (%p141) target = $region24
      $region23: #{tpu_custom_call.1} parent=5 // pred_region
        // Predicated region
        $region25: #{tpu_custom_call.1} parent=23 // pred_check
          %p144 = pneg %p36
        $region26: #{tpu_custom_call.1} parent=23 // pred_check_branch
          %146 = sbr.rel (%p144) target = $region28
        $region27: #{tpu_custom_call.1} parent=23 // pred_region
          %s147 = sand.u32 %s26, 1
          %s148 = scalar_lea.sflag [#allocation3], %s147
          %s149 = sand.u32 %s26, 1
          %s150 = smul.addr %s149, 8
          %s151 = scalar_lea.vmem [#allocation2], %s150
          %153 = vsyncadd %s148, 0
          %s154 = smul.addr %s16, 8
          %s155 = scalar_lea.hbm %s0, %s154
          %s157 = sshll.u32 %s155, 4
          %s158 = int_to_ptr.hbm [resolvable:$true] %s157
          %s159 = sshll.u32 %s151, 4
          %s160 = int_to_ptr.vmem [resolvable:$true] %s159
          %162 = dma.hbm_to_vmem [thread:$0]  %s158, 128, %s160, %s148
        $region28: #{tpu_custom_call.1} parent=23 // pred_fallthru
          _
      $region24: #{tpu_custom_call.1} parent=5 // pred_fallthru
        _
      %p163 = scmp.le.s32.totalorder 1, %s16
      %p164 = scmp.lt.s32.totalorder %s16, 3
      %p165 = pnand %p163, %p164
      %p166 = pneg %p165
      // Predicated region
      $region29: #{tpu_custom_call.1} parent=5 // pred_check
        _
      $region30: #{tpu_custom_call.1} parent=5 // pred_check_branch
        %168 = sbr.rel (%p165) target = $region32
      $region31: #{tpu_custom_call.1} parent=5 // pred_region
        %s169 = ssub.s32 %s16, 1
        %s170 = sand.u32 %s29, 1
        %s171 = scalar_lea.sflag [#allocation3], %s170
        %s172 = sand.u32 %s29, 1
        %s173 = smul.addr %s172, 8
        %s174 = scalar_lea.vmem [#allocation2], %s173
        // Predicated region
        $region33: #{tpu_custom_call.1} parent=31 // pred_check
          %p175 = pneg %p42
        $region34: #{tpu_custom_call.1} parent=31 // pred_check_branch
          %177 = sbr.rel (%p175) target = $region36
        $region35: #{tpu_custom_call.1} parent=31 // pred_region
          %179 = dma.done %s171, 128
        $region36: #{tpu_custom_call.1} parent=31 // pred_fallthru
          _
        // Predicated region
        $region37: #{tpu_custom_call.1} parent=31 // pred_check
          %p180 = pneg %p63
        $region38: #{tpu_custom_call.1} parent=31 // pred_check_branch
          %182 = sbr.rel (%p180) target = $region40
        $region39: #{tpu_custom_call.1} parent=31 // pred_region
          %184 = dma.done [#allocation6], 16
        $region40: #{tpu_custom_call.1} parent=31 // pred_fallthru
          _
        %s185 = sand.u32 %s29, 1
        %s186 = scalar_lea.sflag [#allocation3], %s185
        %s187 = sand.u32 %s29, 1
        %s188 = smul.addr %s187, 8
        %s189 = scalar_lea.vmem [#allocation2], %s188
        %p190 = pneg %p42
        %p191 = pneg %p39
        %p192 = pneg %p63
        %p193 = pneg %p60
        %p194 = pneg %p84
        %p195 = pneg %p81
        %p196 = pneg %p110
        %p197 = pneg %p107
        %s198 = sand.u32 %s97, 1
        %s199 = scalar_lea.sflag [#allocation4], %s198
        %s200 = sand.u32 %s97, 1
        %s201 = smul.addr %s200, 8
        %s202 = scalar_lea.vmem [#allocation7], %s201
        %v203 = vld [vmem:[%s174] sm:$0xff]
        %v204 = vmul.f32 %v203, %v203
        %205 = vadd.xlane.f32.xlu0 %v204
        %v206 = vpop.xlane.xlu0 %205
        %v207 = vmul.f32 %v206, 0.0078125
        %v208 = vadd.f32 %v207, 1e-05
        %v209 = vrsqrt.pop %v208
        %v210 = vmul.f32 %v209, %v208
        %v211 = vmul.f32 %v210, %v209
        %v212 = vmul.f32 0.5, %v211
        %v213 = vsub.f32 1.5, %v212
        %v214 = vmul.f32 %v209, %v213
        %vm215 = vweird.f32 %v208
        %vm216 = vweird.f32 %v209
        %vm217 = vmor %vm215, %vm216
        %v218 = vsel %vm217, %v209, %v214
        %v219 = vmul.f32 %v203, %v218
        %v220 = vld [vmem:[#allocation5] sm:$0x1]
        %v222 = vperm.slane %v220, 0
        %v224 = vmul.f32 %v219, %v222
        %v225 = vld [vmem:[%s2] sm:$0x1]
        %v227 = vperm.slane %v225, 0
        %v229 = vadd.f32 %v224, %v227
        %230 = vst [vmem:[%s202] sm:$0xff] %v229
        %s231 = sand.u32 %s97, 1
        %s232 = scalar_lea.sflag [#allocation4], %s231
        %s233 = sand.u32 %s97, 1
        %s234 = smul.addr %s233, 8
        %s235 = scalar_lea.vmem [#allocation7], %s234
        // Predicated region
        $region41: #{tpu_custom_call.1} parent=31 // pred_check
          %p236 = pneg %p107
        $region42: #{tpu_custom_call.1} parent=31 // pred_check_branch
          %238 = sbr.rel (%p236) target = $region44
        $region43: #{tpu_custom_call.1} parent=31 // pred_region
          %240 = vsyncadd %s232, 0
          %s241 = smul.addr %s21, 8
          %s242 = scalar_lea.hbm %s3, %s241
          %s244 = sshll.u32 %s235, 4
          %s245 = int_to_ptr.vmem [resolvable:$true] %s244
          %s246 = sshll.u32 %s242, 4
          %s247 = int_to_ptr.hbm [resolvable:$true] %s246
          %249 = dma.vmem_to_hbm [thread:$0]  %s245, 128, %s247, %s232
        $region44: #{tpu_custom_call.1} parent=31 // pred_fallthru
          _
      $region32: #{tpu_custom_call.1} parent=5 // pred_fallthru
        _
      %p250 = scmp.le.s32.totalorder 2, %s16
      // Predicated region
      $region45: #{tpu_custom_call.1} parent=5 // pred_check
        %p251 = pneg %p250
      $region46: #{tpu_custom_call.1} parent=5 // pred_check_branch
        %253 = sbr.rel (%p251) target = $region48
      $region47: #{tpu_custom_call.1} parent=5 // pred_region
        %s254 = ssub.s32 %s16, 2
        // Predicated region
        $region49: #{tpu_custom_call.1} parent=47 // pred_check
          %p255 = pneg %p113
        $region50: #{tpu_custom_call.1} parent=47 // pred_check_branch
          %257 = sbr.rel (%p255) target = $region52
        $region51: #{tpu_custom_call.1} parent=47 // pred_region
          %s258 = sand.u32 %s98, 1
          %s259 = scalar_lea.sflag [#allocation4], %s258
          %s260 = sand.u32 %s98, 1
          %s261 = smul.addr %s260, 8
          %s262 = scalar_lea.vmem [#allocation7], %s261
          %264 = dma.done %s259, 128
        $region52: #{tpu_custom_call.1} parent=47 // pred_fallthru
          _
      $region48: #{tpu_custom_call.1} parent=5 // pred_fallthru
        _
    $region6: #{tpu_custom_call.1} parent=1 // loop_footer
      %s20 = sadd.s32 1, %s16
    $region7: #{tpu_custom_call.1} parent=1 // loop_footer_branch
      %15 = sbr.rel target = $region3
    $region8: #{tpu_custom_call.1} parent=1 // loop_exit
      _
    %265 = vsyncpa [#allocation3], 1
    %s266 = scalar_lea.sflag [#allocation3], 1
    %267 = vsyncpa %s266, 1
    %268 = vsyncpa [#allocation6], 1
    %269 = vsyncpa [#allocation4], 1
    %s270 = scalar_lea.sflag [#allocation4], 1
    %271 = vsyncpa %s270, 1

</llo_original>
